<compile_context>
chip_gen: v7x
topology: tpu7x:2x2x1
jax: 0.10.0
libtpu: 0.0.40
codegen_flags: <defaults>
</compile_context>

<pallas_src>
import functools

import jax
import jax.numpy as jnp
from jax import lax
from jax.experimental import pallas as pl
from jax.experimental.pallas import tpu as pltpu

LANES = 128
MAX_TR = 4096                   # 4096*128*4B = 2 MiB per f32 input block
VMEM_LIMIT = 32 * 1024 * 1024   # covers v5e's smaller default scoped VMEM


def _num_tensorcores():
    """Best-effort TensorCore count (v7x: 2; v5e/v6e: 1)."""
    try:
        info = pltpu.get_tpu_info()
        for name in ("num_cores", "tensorcore_count", "num_tensorcores",
                     "cores_per_chip", "core_count"):
            v = getattr(info, name, None)
            if isinstance(v, int) and v > 0:
                return v
    except Exception:
        pass
    try:
        v = getattr(jax.devices()[0], "num_cores", None)
        if isinstance(v, int) and v > 0:
            return v
    except Exception:
        pass
    return 1


def _bce_blur_kernel(pred_ref, true_ref, out_ref, acc_ref, *,
                     inv_alpha, tiles_per_slice, tr, n_elems, tiles_full,
                     needs_mask):
    c = pl.program_id(0)                  # parallel (per-core) slice axis
    i = pl.program_id(1)                  # sequential reduction axis
    t = c * tiles_per_slice + i           # logical tile index

    @pl.when(i == 0)
    def _():
        acc_ref[...] = jnp.zeros_like(acc_ref)

    x = pred_ref[...].astype(jnp.float32)
    y = true_ref[...].astype(jnp.float32)

    # One exp shared by the stable BCE term and the sigmoid.
    e = jnp.exp(-jnp.abs(x))                                # exp(-|x|)
    bce = jnp.maximum(x, 0.0) - x * y + jnp.log1p(e)        # stable BCE w/ logits
    # sigmoid(x) = where(x>=0, 1, e) / (1+e); approx reciprocal -> EUP slot,
    # no Newton-refinement VALU work.
    p = jnp.where(x >= 0.0, 1.0, e) * pl.reciprocal(1.0 + e, approx=True)
    dx = p - y
    alpha_factor = 1.0 - jnp.exp((dx - 1.0) * inv_alpha)
    loss = bce * alpha_factor

    def _accum(vals):
        # Vreg-shaped VPU partial sum; single cross-lane reduce per slice.
        acc_ref[...] += vals.reshape(tr // 8, 8, LANES).sum(axis=0)

    if needs_mask:  # static: some tile holds rows past the valid data
        @pl.when(t < tiles_full)          # fully-valid tiles: no mask work
        def _():
            _accum(loss)

        @pl.when(t >= tiles_full)         # at most 2 tiles per call at runtime
        def _():
            row0 = t * tr
            ridx = lax.broadcasted_iota(jnp.int32, (tr, LANES), 0) + row0
            cidx = lax.broadcasted_iota(jnp.int32, (tr, LANES), 1)
            full_rows = n_elems // LANES
            rem = n_elems % LANES
            valid = (ridx < full_rows) | ((ridx == full_rows) & (cidx < rem))
            _accum(jnp.where(valid, loss, 0.0))
    else:
        _accum(loss)

    @pl.when(i == tiles_per_slice - 1)
    def _():
        out_ref[...] = jnp.sum(acc_ref[...]).reshape(1, 1, 1)


def bce_blur_with_logits_loss(pred, true, alpha=0.05):
    assert pred.shape == true.shape
    n_elems = pred.size
    assert n_elems > 0
    inv_alpha = 1.0 / (alpha + 1e-4)

    flat_pred = pred.reshape(-1)
    flat_true = true.reshape(-1)
    rows = n_elems // LANES
    rem128 = n_elems % LANES
    if rem128:
        # Reshape to (rows, 128) needs a 128-multiple: pad by < 128 elements
        # (only copy in the wrapper, and only when actually required).
        rows += 1
        flat_pred = jnp.pad(flat_pred, (0, LANES - rem128))
        flat_true = jnp.pad(flat_true, (0, LANES - rem128))
    p2 = flat_pred.reshape(rows, LANES)   # zero-copy when rem128 == 0
    t2 = flat_true.reshape(rows, LANES)

    # Row tile: as large as VMEM comfortably allows; multiple of 16 so bf16
    # inputs keep fully-packed sublanes.
    tr = min(MAX_TR, ((rows + 15) // 16) * 16)
    tiles_needed = pl.cdiv(rows, tr)
    num_slices = max(1, min(_num_tensorcores(), 2, tiles_needed))
    tiles_per_slice = pl.cdiv(tiles_needed, num_slices)
    total_tiles = num_slices * tiles_per_slice
    tiles_full = n_elems // (tr * LANES)          # tiles with only valid rows
    needs_mask = total_tiles * tr * LANES > n_elems

    kernel = functools.partial(
        _bce_blur_kernel,
        inv_alpha=inv_alpha,
        tiles_per_slice=tiles_per_slice,
        tr=tr,
        n_elems=n_elems,
        tiles_full=tiles_full,
        needs_mask=needs_mask,
    )

    in_map = lambda c, i: (c * tiles_per_slice + i, 0)

    partials = pl.pallas_call(
        kernel,
        out_shape=jax.ShapeDtypeStruct((num_slices, 1, 1), jnp.float32),
        grid_spec=pltpu.PrefetchScalarGridSpec(
            num_scalar_prefetch=0,
            grid=(num_slices, tiles_per_slice),
            in_specs=[
                pl.BlockSpec((tr, LANES), in_map),
                pl.BlockSpec((tr, LANES), in_map),
            ],
            out_specs=pl.BlockSpec((1, 1, 1), lambda c, i: (c, 0, 0)),
            scratch_shapes=[pltpu.VMEM((8, LANES), jnp.float32)],
        ),
        compiler_params=pltpu.CompilerParams(
            dimension_semantics=("parallel", "arbitrary"),
            vmem_limit_bytes=VMEM_LIMIT),
    )(p2, t2)

    return (jnp.sum(partials) / jnp.float32(n_elems)).astype(jnp.float32)


def _reference(pred, true, alpha=0.05):
    x = pred.astype(jnp.float32)
    y = true.astype(jnp.float32)
    bce = jnp.maximum(x, 0.0) - x * y + jnp.log1p(jnp.exp(-jnp.abs(x)))
    p = jax.nn.sigmoid(x)
    dx = p - y
    af = 1.0 - jnp.exp((dx - 1.0) / (alpha + 1e-4))
    return jnp.mean(bce * af)


if __name__ == "__main__":
    key = jax.random.PRNGKey(0)
    k1, k2 = jax.random.split(key)
    # NCHW-shaped inputs, as a PyTorch conv head would produce.
    pred = jax.random.normal(k1, (2, 4, 16, 16), dtype=jnp.float32)
    true = (jax.random.uniform(k2, (2, 4, 16, 16)) > 0.5).astype(jnp.float32)

    out = bce_blur_with_logits_loss(pred, true, alpha=0.05)
    out = jax.block_until_ready(out)

    ref = _reference(pred, true, alpha=0.05)
    # rtol loosened slightly for pl.reciprocal(approx=True) in the sigmoid.
    assert jnp.allclose(out, ref, rtol=2e-3, atol=1e-6), (out, ref)
    print("KERNEL_OK")
</pallas_src>

<mosaic_0001>
module attributes {stable_mosaic.version = 11 : i64} {
  func.func @_bce_blur_kernel(%arg0: i32, %arg1: i32, %arg2: memref<16x128xf32, #tpu.memory_space<vmem>>, %arg3: memref<16x128xf32, #tpu.memory_space<vmem>>, %arg4: memref<1x1x1xf32, #tpu.memory_space<vmem>>, %arg5: memref<8x128xf32, #tpu.memory_space<vmem>>) attributes {dimension_semantics = [#tpu.dimension_semantics<parallel>, #tpu.dimension_semantics<arbitrary>], iteration_bounds = array<i64: 1, 1>, scalar_prefetch = 0 : i64, scratch_operands = 1 : i64, tpu.core_type = #tpu.core_type<tc>, window_params = [{transform_indices = @transform_0, window_bounds = array<i64: 16, 128>}, {transform_indices = @transform_1, window_bounds = array<i64: 16, 128>}, {transform_indices = @transform_2, window_bounds = array<i64: 1, 1, 1>}]} {
    %c0_i32 = arith.constant 0 : i32
    %0 = arith.cmpi eq, %arg1, %c0_i32 : i32
    %1 = arith.extui %0 : i1 to i32
    %c0_i32_0 = arith.constant 0 : i32
    %2 = arith.cmpi ne, %1, %c0_i32_0 : i32
    scf.if %2 {
      %cst_18 = arith.constant 0.000000e+00 : f32
      %40 = vector.broadcast %cst_18 : f32 to vector<8x128xf32>
      %c0_19 = arith.constant 0 : index
      %c0_20 = arith.constant 0 : index
      %41 = vector.load %arg5[%c0_19, %c0_20] : memref<8x128xf32, #tpu.memory_space<vmem>>, vector<8x128xf32>
      tpu.vector_store %arg5[%c0_19, %c0_20], %40 {strides = array<i32>} : memref<8x128xf32, #tpu.memory_space<vmem>>, vector<8x128xf32>,
    } else {
    }
    %c0 = arith.constant 0 : index
    %c0_1 = arith.constant 0 : index
    %3 = vector.load %arg2[%c0, %c0_1] : memref<16x128xf32, #tpu.memory_space<vmem>>, vector<16x128xf32>
    %c0_2 = arith.constant 0 : index
    %c0_3 = arith.constant 0 : index
    %4 = vector.load %arg3[%c0_2, %c0_3] : memref<16x128xf32, #tpu.memory_space<vmem>>, vector<16x128xf32>
    %5 = math.absf %3 : vector<16x128xf32>
    %cst = arith.constant 0.000000e+00 : f32
    %6 = vector.broadcast %cst : f32 to vector<16x128xf32>
    %7 = arith.subf %6, %5 : vector<16x128xf32>
    %8 = math.exp %7 : vector<16x128xf32>
    %cst_4 = arith.constant 0.000000e+00 : f32
    %9 = vector.broadcast %cst_4 : f32 to vector<16x128xf32>
    %10 = arith.maximumf %3, %9 : vector<16x128xf32>
    %11 = arith.mulf %3, %4 : vector<16x128xf32>
    %12 = arith.subf %10, %11 : vector<16x128xf32>
    %13 = math.log1p %8 : vector<16x128xf32>
    %14 = arith.addf %12, %13 : vector<16x128xf32>
    %cst_5 = arith.constant 0.000000e+00 : f32
    %15 = vector.broadcast %cst_5 : f32 to vector<16x128xf32>
    %16 = arith.cmpf oge, %3, %15 : vector<16x128xf32>
    %cst_6 = arith.constant 1.000000e+00 : f32
    %17 = vector.broadcast %cst_6 : f32 to vector<16x128xf32>
    %18 = arith.select %16, %17, %8 : vector<16x128xi1>, vector<16x128xf32>
    %cst_7 = arith.constant 1.000000e+00 : f32
    %19 = vector.broadcast %cst_7 : f32 to vector<16x128xf32>
    %20 = arith.addf %19, %8 : vector<16x128xf32>
    %21 = tpu.reciprocal %20 {approx = true} : vector<16x128xf32> -> vector<16x128xf32>
    %22 = arith.mulf %18, %21 : vector<16x128xf32>
    %23 = arith.subf %22, %4 : vector<16x128xf32>
    %cst_8 = arith.constant 1.000000e+00 : f32
    %24 = vector.broadcast %cst_8 : f32 to vector<16x128xf32>
    %25 = arith.subf %23, %24 : vector<16x128xf32>
    %cst_9 = arith.constant 19.9600792 : f32
    %26 = vector.broadcast %cst_9 : f32 to vector<16x128xf32>
    %27 = arith.mulf %25, %26 : vector<16x128xf32>
    %28 = math.exp %27 : vector<16x128xf32>
    %cst_10 = arith.constant 1.000000e+00 : f32
    %29 = vector.broadcast %cst_10 : f32 to vector<16x128xf32>
    %30 = arith.subf %29, %28 : vector<16x128xf32>
    %31 = arith.mulf %14, %30 : vector<16x128xf32>
    %c0_11 = arith.constant 0 : index
    %c0_12 = arith.constant 0 : index
    %32 = vector.load %arg5[%c0_11, %c0_12] : memref<8x128xf32, #tpu.memory_space<vmem>>, vector<8x128xf32>
    %33 = vector.shape_cast %31 : vector<16x128xf32> to vector<2x8x128xf32>
    %cst_13 = arith.constant dense<0.000000e+00> : vector<8x128xf32>
    %34 = vector.multi_reduction <add>, %33, %cst_13 [0] : vector<2x8x128xf32> to vector<8x128xf32>
    %35 = arith.addf %32, %34 : vector<8x128xf32>
    %c0_14 = arith.constant 0 : index
    %c0_15 = arith.constant 0 : index
    %36 = vector.load %arg5[%c0_14, %c0_15] : memref<8x128xf32, #tpu.memory_space<vmem>>, vector<8x128xf32>
    tpu.vector_store %arg5[%c0_14, %c0_15], %35 {strides = array<i32>} : memref<8x128xf32, #tpu.memory_space<vmem>>, vector<8x128xf32>,
    %c0_i32_16 = arith.constant 0 : i32
    %37 = arith.cmpi eq, %arg1, %c0_i32_16 : i32
    %38 = arith.extui %37 : i1 to i32
    %c0_i32_17 = arith.constant 0 : i32
    %39 = arith.cmpi ne, %38, %c0_i32_17 : i32
    scf.if %39 {
      %c0_18 = arith.constant 0 : index
      %c0_19 = arith.constant 0 : index
      %40 = vector.load %arg5[%c0_18, %c0_19] : memref<8x128xf32, #tpu.memory_space<vmem>>, vector<8x128xf32>
      %41 = vector.shape_cast %40 : vector<8x128xf32> to vector<1x8x128xf32>
      %cst_20 = arith.constant dense<0.000000e+00> : vector<1xf32>
      %42 = vector.multi_reduction <add>, %41, %cst_20 [1, 2] : vector<1x8x128xf32> to vector<1xf32>
      %43 = vector.shape_cast %42 : vector<1xf32> to vector<1x1x1xf32>
      %44 = vector.extract %43[0, 0, 0] : f32 from vector<1x1x1xf32>
      %45 = vector.broadcast %44 : f32 to vector<1x1x1xf32>
      %c0_21 = arith.constant 0 : index
      %c0_22 = arith.constant 0 : index
      %c0_23 = arith.constant 0 : index
      %46 = vector.load %arg4[%c0_21, %c0_22, %c0_23] : memref<1x1x1xf32, #tpu.memory_space<vmem>>, vector<1x1x1xf32>
      tpu.vector_store %arg4[%c0_21, %c0_22, %c0_23], %45 {strides = array<i32>} : memref<1x1x1xf32, #tpu.memory_space<vmem>>, vector<1x1x1xf32>,
    } else {
    }
    return
  }
  func.func @transform_0(%arg0: i32, %arg1: i32) -> (i32, i32) {
    %c1_i32 = arith.constant 1 : i32
    %0 = arith.muli %arg0, %c1_i32 : i32
    %1 = arith.addi %0, %arg1 : i32
    %c0_i32 = arith.constant 0 : i32
    %c0_i32_0 = arith.constant 0 : i32
    return %1, %c0_i32 : i32, i32
  }
  func.func @transform_1(%arg0: i32, %arg1: i32) -> (i32, i32) {
    %c1_i32 = arith.constant 1 : i32
    %0 = arith.muli %arg0, %c1_i32 : i32
    %1 = arith.addi %0, %arg1 : i32
    %c0_i32 = arith.constant 0 : i32
    %c0_i32_0 = arith.constant 0 : i32
    return %1, %c0_i32 : i32, i32
  }
  func.func @transform_2(%arg0: i32, %arg1: i32) -> (i32, i32, i32) {
    %c0_i32 = arith.constant 0 : i32
    %c0_i32_0 = arith.constant 0 : i32
    %c0_i32_1 = arith.constant 0 : i32
    return %arg0, %c0_i32, %c0_i32_0 : i32, i32, i32
  }
}

</mosaic_0001>

<llo_original>
// kernel: tpu_custom_call.1
$region0: #{tpu_custom_call.1}
  #allocation0 [shape = 'u32[]', space=smem, size = 0x4, offset = 0x4, fixed_abs, tag = 'smem constant byte address 0x4 - core index']
  #allocation1 [shape = 'u32[144,128]{1,0:T(1,128)}', space=vmem, size = 0x12000, scoped, tag = 'internal scratch']
  #allocation2 [shape = 'f32[8,128]{1,0:T(8,128)}', space=vmem, size = 0x1000, scoped, tag = 'scratch operand']
  %s0 = inlined_call_operand.hbm [shape: f32[16,128], index: 0, kind: input, shape index: {}]
  %s1 = inlined_call_operand.hbm [shape: f32[16,128], index: 1, kind: input, shape index: {}]
  %s2 = inlined_call_operand.hbm [shape: f32[1,1,1], index: 2, kind: output, shape index: {}]
  %s3 = sld [smem:[#allocation0]]
  $region34: #{tpu_custom_call.1} parent=0
    _
  %s5 = ssub.s32 1, %s3
  %s6 = scalar_select 0, %s5, %s3
  $region1: #{tpu_custom_call.1} parent=0
    #allocation3 [shape = 'u8[8192]{0}', space=vmem, size = 0x2000, scoped, tag = 'input window, operand 0, single buffered']
    #allocation4 [shape = 's32[1]{0}', space=sflag, size = 0x4, scoped, tag = 'scoped memory for tpu_custom_call.1']
    #allocation5 [shape = 's32[1]{0}', space=sflag, size = 0x4, scoped, tag = 'scoped memory for tpu_custom_call.1']
    #allocation6 [shape = 'u8[8192]{0}', space=vmem, size = 0x2000, scoped, tag = 'input window, operand 1, single buffered']
    #allocation7 [shape = 's32[1]{0}', space=sflag, size = 0x4, scoped, tag = 'scoped memory for tpu_custom_call.1']
    #allocation8 [shape = 'u8[512]{0}', space=vmem, size = 0x400, scoped, tag = 'output window, operand 0, single buffered']
    %7 = vsyncpa [#allocation4], 0
    %8 = vsyncpa [#allocation7], 0
    %9 = vsyncpa [#allocation5], 0
    // Predicated region
    $region2: #{tpu_custom_call.1} parent=1 // pred_check
      _
    $region3: #{tpu_custom_call.1} parent=1 // pred_check_branch
      %11 = sbr.rel (0) target = $region5
    $region4: #{tpu_custom_call.1} parent=1 // pred_region
      %s12 = sadd.s32 0, 0
      %s13 = smul.u32 2, %s12
      %s15 = ssub.s32 256, 256
      %16 = vsyncadd [#allocation4], %s15
      %s17 = smul.addr %s13, 128
      %s18 = scalar_lea.hbm %s0, %s17
      %s19 = sshll.u32 [#allocation3], 4
      %s20 = int_to_ptr.vmem [resolvable:$true] %s19
      %25 = dma.hbm_to_vmem [thread:$0]  %s18, 256, %s20, [#allocation4], 128, 128, 8
    $region5: #{tpu_custom_call.1} parent=1 // pred_fallthru
      _
    // Predicated region
    $region6: #{tpu_custom_call.1} parent=1 // pred_check
      _
    $region7: #{tpu_custom_call.1} parent=1 // pred_check_branch
      %27 = sbr.rel (0) target = $region9
    $region8: #{tpu_custom_call.1} parent=1 // pred_region
      %s28 = sadd.s32 0, 0
      %s29 = smul.u32 2, %s28
      %s31 = ssub.s32 256, 256
      %32 = vsyncadd [#allocation7], %s31
      %s33 = smul.addr %s29, 128
      %s34 = scalar_lea.hbm %s1, %s33
      %s35 = sshll.u32 [#allocation6], 4
      %s36 = int_to_ptr.vmem [resolvable:$true] %s35
      %41 = dma.hbm_to_vmem [thread:$0]  %s34, 256, %s36, [#allocation7], 128, 128, 8
    $region9: #{tpu_custom_call.1} parent=1 // pred_fallthru
      _
    // Predicated region
    $region10: #{tpu_custom_call.1} parent=1 // pred_check
      _
    $region11: #{tpu_custom_call.1} parent=1 // pred_check_branch
      %43 = sbr.rel (0) target = $region13
    $region12: #{tpu_custom_call.1} parent=1 // pred_region
      %44 = dma.done [#allocation4], 256
    $region13: #{tpu_custom_call.1} parent=1 // pred_fallthru
      _
    // Predicated region
    $region14: #{tpu_custom_call.1} parent=1 // pred_check
      _
    $region15: #{tpu_custom_call.1} parent=1 // pred_check_branch
      %46 = sbr.rel (0) target = $region17
    $region16: #{tpu_custom_call.1} parent=1 // pred_region
      %47 = dma.done [#allocation7], 256
    $region17: #{tpu_custom_call.1} parent=1 // pred_fallthru
      _
    %s48 = sadd.s32 0, 0
    %s49 = smul.u32 2, %s48
    %s50 = sadd.s32 0, 0
    %s51 = smul.u32 2, %s50
    %p52 = scmp.eq.s32.totalorder 0, 0
    // Predicated region
    $region18: #{tpu_custom_call.1} parent=1 // pred_check
      %p53 = pneg %p52
    $region19: #{tpu_custom_call.1} parent=1 // pred_check_branch
      %55 = sbr.rel (%p53) target = $region21
    $region20: #{tpu_custom_call.1} parent=1 // pred_region
      %56 = vst [vmem:[#allocation2] sm:$0xff] 0.0
    $region21: #{tpu_custom_call.1} parent=1 // pred_fallthru
      _
    %v57 = vld [vmem:[#allocation3] sm:$0xff]
    %v58 = vld [vmem:[#allocation3 + $0x8] sm:$0xff]
    %v59 = vld [vmem:[#allocation6] sm:$0xff]
    %v60 = vld [vmem:[#allocation6 + $0x8] sm:$0xff]
    %v61 = vand.u32 2147483647, %v57
    %v62 = vand.u32 2147483647, %v58
    %v63 = vsub.f32 0.0, %v61
    %v64 = vsub.f32 0.0, %v62
    %v65 = vmul.f32 %v63, 1.442695
    %v66 = vpow.pop %v65
    %v67 = vmul.f32 %v64, 1.442695
    %v68 = vpow.pop %v67
    %v69 = vmax.f32 %v57, 0.0
    %v70 = vmax.f32 %v58, 0.0
    %v71 = vmul.f32 %v57, %v59
    %v72 = vmul.f32 %v58, %v60
    %v73 = vsub.f32 %v69, %v71
    %v74 = vsub.f32 %v70, %v72
    %v75 = vadd.f32 %v66, 1.0
    %v76 = vlog2.pop %v75
    %v77 = vmul.f32 %v76, 0.6931472
    %v78 = vmul.f32 -0.5, %v66
    %v79 = vadd.f32 %v78, 1.0
    %v80 = vmul.f32 %v79, %v66
    %v81 = vand.u32 2147483647, %v66
    %vm82 = vcmp.lt.f32.partialorder %v81, 0.0004427343
    %v83 = vsel %vm82, %v80, %v77
    %v84 = vadd.f32 %v68, 1.0
    %v85 = vlog2.pop %v84
    %v86 = vmul.f32 %v85, 0.6931472
    %v87 = vmul.f32 -0.5, %v68
    %v88 = vadd.f32 %v87, 1.0
    %v89 = vmul.f32 %v88, %v68
    %v90 = vand.u32 2147483647, %v68
    %vm91 = vcmp.lt.f32.partialorder %v90, 0.0004427343
    %v92 = vsel %vm91, %v89, %v86
    %v93 = vadd.f32 %v73, %v83
    %v94 = vadd.f32 %v74, %v92
    %vm95 = vcmp.ge.f32.partialorder %v57, 0.0
    %vm96 = vcmp.ge.f32.partialorder %v58, 0.0
    %v97 = vsel %vm95, 1.0, %v66
    %v98 = vsel %vm96, 1.0, %v68
    %v99 = vadd.f32 %v66, 1.0
    %v100 = vadd.f32 %v68, 1.0
    %v101 = vrcp.pop %v99
    %v102 = vrcp.pop %v100
    %v103 = vmul.f32 %v97, %v101
    %v104 = vmul.f32 %v98, %v102
    %v105 = vsub.f32 %v103, %v59
    %v106 = vsub.f32 %v104, %v60
    %v107 = vsub.f32 %v105, 1.0
    %v108 = vsub.f32 %v106, 1.0
    %v109 = vmul.f32 %v107, 19.96008
    %v110 = vmul.f32 %v108, 19.96008
    %v111 = vmul.f32 %v109, 1.442695
    %v112 = vpow.pop %v111
    %v113 = vmul.f32 %v110, 1.442695
    %v114 = vpow.pop %v113
    %v115 = vsub.f32 1.0, %v112
    %v116 = vsub.f32 1.0, %v114
    %v117 = vmul.f32 %v93, %v115
    %v118 = vmul.f32 %v94, %v116
    %v119 = vld [vmem:[#allocation2] sm:$0xff]
    %v120 = vadd.f32 %v117, %v118
    %v121 = vadd.f32 %v119, %v120
    %122 = vst [vmem:[#allocation2] sm:$0xff] %v121
    // Predicated region
    $region22: #{tpu_custom_call.1} parent=1 // pred_check
      %p123 = pneg %p52
    $region23: #{tpu_custom_call.1} parent=1 // pred_check_branch
      %125 = sbr.rel (%p123) target = $region25
    $region24: #{tpu_custom_call.1} parent=1 // pred_region
      %v126 = vld [vmem:[#allocation2] sm:$0xff]
      %127 = vadd.xlane.f32.xlu0 %v126
      %v128 = vpop.xlane.xlu0 %127
      %v129 = vrot.slane %v128, 4
      %v130 = vadd.f32 %v128, %v129
      %v131 = vrot.slane %v130, 2
      %v132 = vadd.f32 %v130, %v131
      %v133 = vrot.slane %v132, 1
      %v134 = vadd.f32 %v132, %v133
      %s135 = vtos %v134
      %v136 = vstv %s135
      %vm137 = vcmask 0
      %138 = vst.msk [vmem:[#allocation8] sm:$0x1] %vm137, %v136
    $region25: #{tpu_custom_call.1} parent=1 // pred_fallthru
      _
    // Predicated region
    $region26: #{tpu_custom_call.1} parent=1 // pred_check
      _
    $region27: #{tpu_custom_call.1} parent=1 // pred_check_branch
      %140 = sbr.rel (0) target = $region29
    $region28: #{tpu_custom_call.1} parent=1 // pred_region
      %s142 = ssub.s32 16, 16
      %143 = vsyncadd [#allocation5], %s142
      %s145 = sshll.u32 [#allocation8], 4
      %s146 = int_to_ptr.vmem [resolvable:$true] %s145
      %148 = dma.vmem_to_hbm [thread:$0]  %s146, 16, %s2, [#allocation5]
    $region29: #{tpu_custom_call.1} parent=1 // pred_fallthru
      _
    // Predicated region
    $region30: #{tpu_custom_call.1} parent=1 // pred_check
      _
    $region31: #{tpu_custom_call.1} parent=1 // pred_check_branch
      %150 = sbr.rel (0) target = $region33
    $region32: #{tpu_custom_call.1} parent=1 // pred_region
      %151 = dma.done [#allocation5], 16
    $region33: #{tpu_custom_call.1} parent=1 // pred_fallthru
      _
    %152 = vsyncpa [#allocation4], 1
    %153 = vsyncpa [#allocation7], 1
    %154 = vsyncpa [#allocation5], 1

</llo_original>
